<compile_context>
chip_gen: v6e
topology: v6e:2x2x1
jax: 0.10.0
libtpu: 0.0.40
codegen_flags: <defaults>
</compile_context>

<pallas_src>
import jax
import jax.numpy as jnp
from jax.experimental import pallas as pl
from jax.experimental.pallas import tpu as pltpu


def _round_up(n, m):
    return ((n + m - 1) // m) * m


def _make_mlp_kernel(n_layers, compute_dtype):
    """Kernel for one batch tile. Activations kept as [features, TB]."""

    def kernel(*refs):
        x_ref = refs[0]          # [TB, D]        compute_dtype
        o_ref = refs[-1]         # [out_size, TB] float32 (lane-dense)
        wb_refs = refs[1:-1]     # w_i [out_i, in_i] compute_dtype, b_i [out_i, 1] f32

        nt = (((1,), (1,)), ((), ()))   # A @ B^T  (layer 0: rhs is x [TB, D])
        nn = (((1,), (0,)), ((), ()))   # A @ B    (later layers: rhs is h [in_i, TB])

        h = x_ref[...]
        for li in range(n_layers):
            w_ref = wb_refs[2 * li]
            b_ref = wb_refs[2 * li + 1]
            dims = nt if li == 0 else nn
            h = jax.lax.dot_general(w_ref[...], h, dims,
                                    preferred_element_type=jnp.float32)
            h = h + b_ref[...]                       # [out_i,1] broadcast over lanes, f32
            if li < n_layers - 1:
                h = jnp.maximum(h, 0.0).astype(compute_dtype)
        o_ref[...] = h.astype(o_ref.dtype)

    return kernel


def aux_classifier_forward(x, params, *, block_rows=512,
                           compute_dtype=jnp.bfloat16):
    """params = [(w, b), ...] in PyTorch nn.Linear layout: w [out, in], b [out]."""
    batch, d_in = x.shape
    n_layers = len(params)
    out_size = params[-1][0].shape[0]

    # Batch tile: it is the lane axis of the output -> multiple of 128.
    # 512 default per tile-size sweep (>=85% HBM roofline); >=128 fills MXU.
    tb = _round_up(min(block_rows, _round_up(batch, 128)), 128)
    bp = _round_up(batch, tb)
    grid = (bp // tb,)

    xp = x
    if bp != batch:
        xp = jnp.pad(xp, ((0, bp - batch), (0, 0)))
    xp = xp.astype(compute_dtype)   # halve HBM traffic of the dominant stream
    itemsize = xp.dtype.itemsize

    args = [xp]
    in_specs = [pl.BlockSpec((tb, d_in), lambda i: (i, 0))]
    for (w, b) in params:
        wt = w.astype(compute_dtype)                  # [out_i, in_i] (torch layout)
        bc = b.reshape(-1, 1).astype(jnp.float32)     # [out_i, 1]
        args += [wt, bc]
        # Constant index maps -> weights/biases stay VMEM-resident across steps.
        in_specs += [pl.BlockSpec(wt.shape, lambda i: (0, 0)),
                     pl.BlockSpec(bc.shape, lambda i: (0, 0))]

    flops = 2 * bp * sum(int(w.shape[0]) * int(w.shape[1]) for (w, _) in params)
    bytes_accessed = int(xp.size * itemsize + out_size * bp * 4
                         + sum(w.size * itemsize + b.size * 4 for (w, b) in params))

    out_t = pl.pallas_call(
        _make_mlp_kernel(n_layers, compute_dtype),
        out_shape=jax.ShapeDtypeStruct((out_size, bp), jnp.float32),
        grid=grid,
        in_specs=in_specs,
        out_specs=pl.BlockSpec((out_size, tb), lambda i: (0, i)),
        compiler_params=pltpu.CompilerParams(
            dimension_semantics=("parallel",),          # shard batch over v7x's 2 TCs
            vmem_limit_bytes=32 * 1024 * 1024),         # safe on v5e/v6e/v7x
        cost_estimate=pl.CostEstimate(flops=flops, transcendentals=0,
                                      bytes_accessed=bytes_accessed),
    )(*args)

    # (out_size, bp) -> (batch, out_size); for out_size == 1 this is a cheap reshape.
    return out_t[:, :batch].T


def init_params(key, emb_size, factor_num, aux_depth=3, out_size=1):
    """nn.Linear-style init (uniform +-1/sqrt(fan_in)); torch layout w [out, in]."""
    full = emb_size * factor_num
    dims = []
    cur = full
    for i in range(aux_depth - 1):
        in_d = full // (2 ** i)
        dims.append((in_d, in_d // 2))
        cur = in_d // 2
    dims.append((cur, out_size))

    params = []
    for (in_d, out_d) in dims:
        key, kw, kb = jax.random.split(key, 3)
        bound = 1.0 / (in_d ** 0.5)
        w = jax.random.uniform(kw, (out_d, in_d), jnp.float32, -bound, bound)
        b = jax.random.uniform(kb, (out_d,), jnp.float32, -bound, bound)
        params.append((w, b))
    return params


def reference_forward(x, params, compute_dtype=jnp.bfloat16):
    """Pure-JAX reference with the same bf16-input / f32-accumulation recipe."""
    h = x.astype(compute_dtype)
    n = len(params)
    for li, (w, b) in enumerate(params):
        h = jnp.dot(h, w.T.astype(compute_dtype),
                    preferred_element_type=jnp.float32) + b.astype(jnp.float32)
        if li < n - 1:
            h = jnp.maximum(h, 0.0).astype(compute_dtype)
    return h


if __name__ == "__main__":
    # Small shapes consistent with the module: emb_size=32, factor_num=1
    # -> MLP 32 -> 16 -> 8 -> 1; batch=512 with 128-row tiles -> grid=(4,)
    # so the batch pipeline actually exercises multiple tiles.
    key = jax.random.PRNGKey(0)
    kx, kp = jax.random.split(key)

    batch = 512
    emb_size, factor_num, out_size = 32, 1, 1
    d_in = emb_size * factor_num

    x = jax.random.normal(kx, (batch, d_in), jnp.float32)
    params = init_params(kp, emb_size, factor_num, aux_depth=3, out_size=out_size)

    out = aux_classifier_forward(x, params, block_rows=128)
    out = jax.block_until_ready(out)

    ref = reference_forward(x, params)
    assert out.shape == (batch, out_size), out.shape
    assert jnp.allclose(out, ref, atol=5e-3, rtol=5e-3), "mismatch vs reference"

    print("KERNEL_OK")
</pallas_src>

<mosaic_0001>
module attributes {stable_mosaic.version = 11 : i64} {
  func.func @kernel(%arg0: i32, %arg1: memref<128x32xbf16, #tpu.memory_space<vmem>>, %arg2: memref<16x32xbf16, #tpu.memory_space<vmem>>, %arg3: memref<16x1xf32, #tpu.memory_space<vmem>>, %arg4: memref<8x16xbf16, #tpu.memory_space<vmem>>, %arg5: memref<8x1xf32, #tpu.memory_space<vmem>>, %arg6: memref<1x8xbf16, #tpu.memory_space<vmem>>, %arg7: memref<1x1xf32, #tpu.memory_space<vmem>>, %arg8: memref<1x128xf32, #tpu.memory_space<vmem>>) attributes {dimension_semantics = [#tpu.dimension_semantics<parallel>], iteration_bounds = array<i64: 4>, scalar_prefetch = 0 : i64, scratch_operands = 0 : i64, tpu.core_type = #tpu.core_type<tc>, window_params = [{transform_indices = @transform_0, window_bounds = array<i64: 128, 32>}, {pipeline_mode = #tpu.pipeline_mode<synchronous>, transform_indices = @transform_1, window_bounds = array<i64: 16, 32>}, {pipeline_mode = #tpu.pipeline_mode<synchronous>, transform_indices = @transform_2, window_bounds = array<i64: 16, 1>}, {pipeline_mode = #tpu.pipeline_mode<synchronous>, transform_indices = @transform_3, window_bounds = array<i64: 8, 16>}, {pipeline_mode = #tpu.pipeline_mode<synchronous>, transform_indices = @transform_4, window_bounds = array<i64: 8, 1>}, {pipeline_mode = #tpu.pipeline_mode<synchronous>, transform_indices = @transform_5, window_bounds = array<i64: 1, 8>}, {pipeline_mode = #tpu.pipeline_mode<synchronous>, transform_indices = @transform_6, window_bounds = array<i64: 1, 1>}, {transform_indices = @transform_7, window_bounds = array<i64: 1, 128>}]} {
    %c0 = arith.constant 0 : index
    %c0_0 = arith.constant 0 : index
    %0 = vector.load %arg1[%c0, %c0_0] : memref<128x32xbf16, #tpu.memory_space<vmem>>, vector<128x32xbf16>
    %c0_1 = arith.constant 0 : index
    %c0_2 = arith.constant 0 : index
    %1 = vector.load %arg2[%c0_1, %c0_2] : memref<16x32xbf16, #tpu.memory_space<vmem>>, vector<16x32xbf16>
    %cst = arith.constant dense<0.000000e+00> : vector<16x128xf32>
    %2 = tpu.matmul %1, %0, %cst {dimension_numbers = #tpu.dot_dimension_numbers<[1], [1], [0], [0], [0, 0, 1, 0], [], []>} : vector<16x32xbf16>, vector<128x32xbf16>, vector<16x128xf32> -> vector<16x128xf32>
    %c0_3 = arith.constant 0 : index
    %c0_4 = arith.constant 0 : index
    %3 = vector.load %arg3[%c0_3, %c0_4] : memref<16x1xf32, #tpu.memory_space<vmem>>, vector<16x1xf32>
    %4 = vector.broadcast %3 : vector<16x1xf32> to vector<16x128xf32>
    %5 = arith.addf %2, %4 : vector<16x128xf32>
    %cst_5 = arith.constant 0.000000e+00 : f32
    %6 = vector.broadcast %cst_5 : f32 to vector<16x128xf32>
    %7 = arith.maximumf %5, %6 : vector<16x128xf32>
    %8 = arith.truncf %7 : vector<16x128xf32> to vector<16x128xbf16>
    %c0_6 = arith.constant 0 : index
    %c0_7 = arith.constant 0 : index
    %9 = vector.load %arg4[%c0_6, %c0_7] : memref<8x16xbf16, #tpu.memory_space<vmem>>, vector<8x16xbf16>
    %cst_8 = arith.constant dense<0.000000e+00> : vector<8x128xf32>
    %10 = tpu.matmul %9, %8, %cst_8 {dimension_numbers = #tpu.dot_dimension_numbers<[1], [0], [0], [1], [0, 0, 1, 1], [], []>} : vector<8x16xbf16>, vector<16x128xbf16>, vector<8x128xf32> -> vector<8x128xf32>
    %c0_9 = arith.constant 0 : index
    %c0_10 = arith.constant 0 : index
    %11 = vector.load %arg5[%c0_9, %c0_10] : memref<8x1xf32, #tpu.memory_space<vmem>>, vector<8x1xf32>
    %12 = vector.broadcast %11 : vector<8x1xf32> to vector<8x128xf32>
    %13 = arith.addf %10, %12 : vector<8x128xf32>
    %cst_11 = arith.constant 0.000000e+00 : f32
    %14 = vector.broadcast %cst_11 : f32 to vector<8x128xf32>
    %15 = arith.maximumf %13, %14 : vector<8x128xf32>
    %16 = arith.truncf %15 : vector<8x128xf32> to vector<8x128xbf16>
    %c0_12 = arith.constant 0 : index
    %c0_13 = arith.constant 0 : index
    %17 = vector.load %arg6[%c0_12, %c0_13] : memref<1x8xbf16, #tpu.memory_space<vmem>>, vector<1x8xbf16>
    %cst_14 = arith.constant dense<0.000000e+00> : vector<1x128xf32>
    %18 = tpu.matmul %17, %16, %cst_14 {dimension_numbers = #tpu.dot_dimension_numbers<[1], [0], [0], [1], [0, 0, 1, 1], [], []>} : vector<1x8xbf16>, vector<8x128xbf16>, vector<1x128xf32> -> vector<1x128xf32>
    %c0_15 = arith.constant 0 : index
    %c0_16 = arith.constant 0 : index
    %19 = vector.load %arg7[%c0_15, %c0_16] : memref<1x1xf32, #tpu.memory_space<vmem>>, vector<1x1xf32>
    %20 = vector.broadcast %19 : vector<1x1xf32> to vector<1x128xf32>
    %21 = arith.addf %18, %20 : vector<1x128xf32>
    %c0_17 = arith.constant 0 : index
    %c0_18 = arith.constant 0 : index
    %22 = vector.load %arg8[%c0_17, %c0_18] : memref<1x128xf32, #tpu.memory_space<vmem>>, vector<1x128xf32>
    tpu.vector_store %arg8[%c0_17, %c0_18], %21 {strides = array<i32>} : memref<1x128xf32, #tpu.memory_space<vmem>>, vector<1x128xf32>,
    return
  }
  func.func @transform_0(%arg0: i32) -> (i32, i32) {
    %c0_i32 = arith.constant 0 : i32
    %c0_i32_0 = arith.constant 0 : i32
    return %arg0, %c0_i32 : i32, i32
  }
  func.func @transform_1(%arg0: i32) -> (i32, i32) {
    %c0_i32 = arith.constant 0 : i32
    %c0_i32_0 = arith.constant 0 : i32
    %c0_i32_1 = arith.constant 0 : i32
    return %c0_i32, %c0_i32_0 : i32, i32
  }
  func.func @transform_2(%arg0: i32) -> (i32, i32) {
    %c0_i32 = arith.constant 0 : i32
    %c0_i32_0 = arith.constant 0 : i32
    %c0_i32_1 = arith.constant 0 : i32
    return %c0_i32, %c0_i32_0 : i32, i32
  }
  func.func @transform_3(%arg0: i32) -> (i32, i32) {
    %c0_i32 = arith.constant 0 : i32
    %c0_i32_0 = arith.constant 0 : i32
    %c0_i32_1 = arith.constant 0 : i32
    return %c0_i32, %c0_i32_0 : i32, i32
  }
  func.func @transform_4(%arg0: i32) -> (i32, i32) {
    %c0_i32 = arith.constant 0 : i32
    %c0_i32_0 = arith.constant 0 : i32
    %c0_i32_1 = arith.constant 0 : i32
    return %c0_i32, %c0_i32_0 : i32, i32
  }
  func.func @transform_5(%arg0: i32) -> (i32, i32) {
    %c0_i32 = arith.constant 0 : i32
    %c0_i32_0 = arith.constant 0 : i32
    %c0_i32_1 = arith.constant 0 : i32
    return %c0_i32, %c0_i32_0 : i32, i32
  }
  func.func @transform_6(%arg0: i32) -> (i32, i32) {
    %c0_i32 = arith.constant 0 : i32
    %c0_i32_0 = arith.constant 0 : i32
    %c0_i32_1 = arith.constant 0 : i32
    return %c0_i32, %c0_i32_0 : i32, i32
  }
  func.func @transform_7(%arg0: i32) -> (i32, i32) {
    %c0_i32 = arith.constant 0 : i32
    %c0_i32_0 = arith.constant 0 : i32
    return %c0_i32, %arg0 : i32, i32
  }
}

</mosaic_0001>

<llo_original>
// kernel: tpu_custom_call.1
$region0: #{tpu_custom_call.1}
  #allocation0 [shape = 'u32[]', space=smem, size = 0x4, offset = 0x4, fixed_abs, tag = 'smem constant byte address 0x4 - core index']
  #allocation1 [shape = 'u32[144,128]{1,0:T(1,128)}', space=vmem, size = 0x12000, scoped, tag = 'internal scratch']
  #allocation2 [shape = 'f32[1,1]{1,0:T(1,128)S(1)}', space=vmem, size = 0x200, scoped, tag = 'scoped memory for tpu_custom_call.1']
  %s0 = inlined_call_operand.vmem [shape: bf16[512,32], index: 0, kind: input, shape index: {}]
  %s1 = inlined_call_operand.vmem [shape: bf16[16,32], index: 1, kind: input, shape index: {}]
  %s2 = inlined_call_operand.vmem [shape: f32[16,1], index: 2, kind: input, shape index: {}]
  %s3 = inlined_call_operand.vmem [shape: bf16[8,16], index: 3, kind: input, shape index: {}]
  %s4 = inlined_call_operand.vmem [shape: f32[8,1], index: 4, kind: input, shape index: {}]
  %s5 = inlined_call_operand.vmem [shape: bf16[1,8], index: 5, kind: input, shape index: {}]
  %s6 = inlined_call_operand.<no memory space> [shape: f32[1,1], index: 6, kind: input, shape index: {}]
  %s7 = inlined_call_operand.hbm [shape: f32[1,512], index: 7, kind: output, shape index: {}]
  %s8 = sld [smem:[#allocation0]]
  $region61: #{tpu_custom_call.1} parent=0
    _
  %s10 = ssub.s32 1, %s8
  %s11 = scalar_select 0, %s10, %s8
  %v12 = vstv %s6
  %13 = vst [vmem:[#allocation2] sm:$0x1] %v12
  $region1: #{tpu_custom_call.1} parent=0
    #allocation3 [shape = 'u8[1024]{0}', space=vmem, size = 0x400, scoped, tag = 'output window, operand 0']
    #allocation4 [shape = 's32[2]{0}', space=sflag, size = 0x8, scoped, tag = 'scoped memory for tpu_custom_call.1']
    %14 = vsyncpa [#allocation4], 0
    %s15 = scalar_lea.sflag [#allocation4], 1
    %16 = vsyncpa %s15, 0
    loop: start=0, step=1, limit=6
    $region2: #{tpu_custom_call.1} parent=1 // loop_pre_header
      _
    $region3: #{tpu_custom_call.1} parent=1 // loop_header
      %s18 = sphi 0, %s22
      %p19 = scmp.ge.s32.totalorder %s18, 6
      %s28 = sphi 0, %s30
      %s31 = sphi 0, %s28
      %s32 = sphi 0, %s31
      %s48 = sphi 0, %s32
      %s52 = sphi 0, %s52
      %s54 = sphi 0, %s52
      %s55 = sphi 0, %s54
      %s69 = sphi 0, %s55
      %s73 = sphi 0, %s73
      %s75 = sphi 0, %s73
      %s76 = sphi 0, %s75
      %s90 = sphi 0, %s76
      %s94 = sphi 0, %s94
      %s96 = sphi 0, %s94
      %s97 = sphi 0, %s96
      %s111 = sphi 0, %s97
      %s115 = sphi 0, %s115
      %s117 = sphi 0, %s115
      %s118 = sphi 0, %s117
      %s132 = sphi 0, %s118
      %s136 = sphi 0, %s136
      %s138 = sphi 0, %s136
      %s139 = sphi 0, %s138
      %s153 = sphi 0, %s139
      %s157 = sphi 0, %s157
      %s159 = sphi 0, %s157
      %s160 = sphi 0, %s159
      %s174 = sphi 0, %s160
      %s180 = sphi 0, %s182
      %s183 = sphi 0, %s180
      %s184 = sphi 0, %s183
      %s200 = sphi 0, %s184
    $region4: #{tpu_custom_call.1} parent=1 // loop_header_branch
      %21 = sbr.rel (%p19) target = $region8
    $region5: #{tpu_custom_call.1} parent=1 // loop_body
      %s23 = ssub.s32 %s18, 1
      %s24 = ssub.s32 %s18, 2
      %s25 = sadd.s32 %s18, 1
      %s26 = ssub.s32 %s18, %s25
      %p27 = scmp.eq.s32.totalorder %s26, 0
      %s29 = sadd.s32 %s28, 1
      %s30 = scalar_select %p27, %s28, %s29
      %p33 = pneg %p27
      %p34 = scmp.eq.s32.totalorder %s18, 3
      %p35 = por %p33, %p34
      %p36 = scmp.ne.s32.totalorder %s28, %s31
      %p37 = scmp.eq.s32.totalorder %s18, 0
      %p38 = por %p36, %p37
      %p39 = scmp.ne.s32.totalorder %s28, %s31
      %p40 = scmp.eq.s32.totalorder %s23, 3
      %p41 = por %p39, %p40
      %p42 = scmp.ne.s32.totalorder %s31, %s32
      %p43 = scmp.eq.s32.totalorder %s23, 0
      %p44 = por %p42, %p43
      %p45 = scmp.ne.s32.totalorder %s31, %s32
      %p46 = scmp.eq.s32.totalorder %s24, 3
      %p47 = por %p45, %p46
      %p49 = scmp.ne.s32.totalorder %s32, %s48
      %p50 = scmp.eq.s32.totalorder %s24, 0
      %p51 = por %p49, %p50
      %s53 = sadd.s32 %s52, 1
      %p56 = scmp.eq.s32.totalorder %s18, 3
      %p57 = scmp.ne.s32.totalorder %s52, %s54
      %p58 = scmp.eq.s32.totalorder %s18, 0
      %p59 = por %p57, %p58
      %p60 = scmp.ne.s32.totalorder %s52, %s54
      %p61 = scmp.eq.s32.totalorder %s23, 3
      %p62 = por %p60, %p61
      %p63 = scmp.ne.s32.totalorder %s54, %s55
      %p64 = scmp.eq.s32.totalorder %s23, 0
      %p65 = por %p63, %p64
      %p66 = scmp.ne.s32.totalorder %s54, %s55
      %p67 = scmp.eq.s32.totalorder %s24, 3
      %p68 = por %p66, %p67
      %p70 = scmp.ne.s32.totalorder %s55, %s69
      %p71 = scmp.eq.s32.totalorder %s24, 0
      %p72 = por %p70, %p71
      %s74 = sadd.s32 %s73, 1
      %p77 = scmp.eq.s32.totalorder %s18, 3
      %p78 = scmp.ne.s32.totalorder %s73, %s75
      %p79 = scmp.eq.s32.totalorder %s18, 0
      %p80 = por %p78, %p79
      %p81 = scmp.ne.s32.totalorder %s73, %s75
      %p82 = scmp.eq.s32.totalorder %s23, 3
      %p83 = por %p81, %p82
      %p84 = scmp.ne.s32.totalorder %s75, %s76
      %p85 = scmp.eq.s32.totalorder %s23, 0
      %p86 = por %p84, %p85
      %p87 = scmp.ne.s32.totalorder %s75, %s76
      %p88 = scmp.eq.s32.totalorder %s24, 3
      %p89 = por %p87, %p88
      %p91 = scmp.ne.s32.totalorder %s76, %s90
      %p92 = scmp.eq.s32.totalorder %s24, 0
      %p93 = por %p91, %p92
      %s95 = sadd.s32 %s94, 1
      %p98 = scmp.eq.s32.totalorder %s18, 3
      %p99 = scmp.ne.s32.totalorder %s94, %s96
      %p100 = scmp.eq.s32.totalorder %s18, 0
      %p101 = por %p99, %p100
      %p102 = scmp.ne.s32.totalorder %s94, %s96
      %p103 = scmp.eq.s32.totalorder %s23, 3
      %p104 = por %p102, %p103
      %p105 = scmp.ne.s32.totalorder %s96, %s97
      %p106 = scmp.eq.s32.totalorder %s23, 0
      %p107 = por %p105, %p106
      %p108 = scmp.ne.s32.totalorder %s96, %s97
      %p109 = scmp.eq.s32.totalorder %s24, 3
      %p110 = por %p108, %p109
      %p112 = scmp.ne.s32.totalorder %s97, %s111
      %p113 = scmp.eq.s32.totalorder %s24, 0
      %p114 = por %p112, %p113
      %s116 = sadd.s32 %s115, 1
      %p119 = scmp.eq.s32.totalorder %s18, 3
      %p120 = scmp.ne.s32.totalorder %s115, %s117
      %p121 = scmp.eq.s32.totalorder %s18, 0
      %p122 = por %p120, %p121
      %p123 = scmp.ne.s32.totalorder %s115, %s117
      %p124 = scmp.eq.s32.totalorder %s23, 3
      %p125 = por %p123, %p124
      %p126 = scmp.ne.s32.totalorder %s117, %s118
      %p127 = scmp.eq.s32.totalorder %s23, 0
      %p128 = por %p126, %p127
      %p129 = scmp.ne.s32.totalorder %s117, %s118
      %p130 = scmp.eq.s32.totalorder %s24, 3
      %p131 = por %p129, %p130
      %p133 = scmp.ne.s32.totalorder %s118, %s132
      %p134 = scmp.eq.s32.totalorder %s24, 0
      %p135 = por %p133, %p134
      %s137 = sadd.s32 %s136, 1
      %p140 = scmp.eq.s32.totalorder %s18, 3
      %p141 = scmp.ne.s32.totalorder %s136, %s138
      %p142 = scmp.eq.s32.totalorder %s18, 0
      %p143 = por %p141, %p142
      %p144 = scmp.ne.s32.totalorder %s136, %s138
      %p145 = scmp.eq.s32.totalorder %s23, 3
      %p146 = por %p144, %p145
      %p147 = scmp.ne.s32.totalorder %s138, %s139
      %p148 = scmp.eq.s32.totalorder %s23, 0
      %p149 = por %p147, %p148
      %p150 = scmp.ne.s32.totalorder %s138, %s139
      %p151 = scmp.eq.s32.totalorder %s24, 3
      %p152 = por %p150, %p151
      %p154 = scmp.ne.s32.totalorder %s139, %s153
      %p155 = scmp.eq.s32.totalorder %s24, 0
      %p156 = por %p154, %p155
      %s158 = sadd.s32 %s157, 1
      %p161 = scmp.eq.s32.totalorder %s18, 3
      %p162 = scmp.ne.s32.totalorder %s157, %s159
      %p163 = scmp.eq.s32.totalorder %s18, 0
      %p164 = por %p162, %p163
      %p165 = scmp.ne.s32.totalorder %s157, %s159
      %p166 = scmp.eq.s32.totalorder %s23, 3
      %p167 = por %p165, %p166
      %p168 = scmp.ne.s32.totalorder %s159, %s160
      %p169 = scmp.eq.s32.totalorder %s23, 0
      %p170 = por %p168, %p169
      %p171 = scmp.ne.s32.totalorder %s159, %s160
      %p172 = scmp.eq.s32.totalorder %s24, 3
      %p173 = por %p171, %p172
      %p175 = scmp.ne.s32.totalorder %s160, %s174
      %p176 = scmp.eq.s32.totalorder %s24, 0
      %p177 = por %p175, %p176
      %s178 = ssub.s32 %s18, %s25
      %p179 = scmp.eq.s32.totalorder %s178, 0
      %s181 = sadd.s32 %s180, 1
      %s182 = scalar_select %p179, %s180, %s181
      %p185 = pneg %p179
      %p186 = scmp.eq.s32.totalorder %s18, 3
      %p187 = por %p185, %p186
      %p188 = scmp.ne.s32.totalorder %s180, %s183
      %p189 = scmp.eq.s32.totalorder %s18, 0
      %p190 = por %p188, %p189
      %p191 = scmp.ne.s32.totalorder %s180, %s183
      %p192 = scmp.eq.s32.totalorder %s23, 3
      %p193 = por %p191, %p192
      %p194 = scmp.ne.s32.totalorder %s183, %s184
      %p195 = scmp.eq.s32.totalorder %s23, 0
      %p196 = por %p194, %p195
      %p197 = scmp.ne.s32.totalorder %s183, %s184
      %p198 = scmp.eq.s32.totalorder %s24, 3
      %p199 = por %p197, %p198
      %p201 = scmp.ne.s32.totalorder %s184, %s200
      %p202 = scmp.eq.s32.totalorder %s24, 0
      %p203 = por %p201, %p202
      %p204 = scmp.le.s32.totalorder 1, %s18
      %p205 = scmp.lt.s32.totalorder %s18, 5
      %p206 = pnand %p204, %p205
      %p207 = pneg %p206
      // Predicated region
      $region9: #{tpu_custom_call.1} parent=5 // pred_check
        _
      $region10: #{tpu_custom_call.1} parent=5 // pred_check_branch
        %209 = sbr.rel (%p206) target = $region12
      $region11: #{tpu_custom_call.1} parent=5 // pred_region
        %s210 = ssub.s32 %s18, 1
        // Predicated region
        $region13: #{tpu_custom_call.1} parent=11 // pred_check
          %p211 = pneg %p65
        $region14: #{tpu_custom_call.1} parent=11 // pred_check_branch
          %213 = sbr.rel (%p211) target = $region16
        $region15: #{tpu_custom_call.1} parent=11 // pred_region
          _
        $region16: #{tpu_custom_call.1} parent=11 // pred_fallthru
          _
        // Predicated region
        $region17: #{tpu_custom_call.1} parent=11 // pred_check
          %p214 = pneg %p86
        $region18: #{tpu_custom_call.1} parent=11 // pred_check_branch
          %216 = sbr.rel (%p214) target = $region20
        $region19: #{tpu_custom_call.1} parent=11 // pred_region
          _
        $region20: #{tpu_custom_call.1} parent=11 // pred_fallthru
          _
        // Predicated region
        $region21: #{tpu_custom_call.1} parent=11 // pred_check
          %p217 = pneg %p107
        $region22: #{tpu_custom_call.1} parent=11 // pred_check_branch
          %219 = sbr.rel (%p217) target = $region24
        $region23: #{tpu_custom_call.1} parent=11 // pred_region
          _
        $region24: #{tpu_custom_call.1} parent=11 // pred_fallthru
          _
        // Predicated region
        $region25: #{tpu_custom_call.1} parent=11 // pred_check
          %p220 = pneg %p128
        $region26: #{tpu_custom_call.1} parent=11 // pred_check_branch
          %222 = sbr.rel (%p220) target = $region28
        $region27: #{tpu_custom_call.1} parent=11 // pred_region
          _
        $region28: #{tpu_custom_call.1} parent=11 // pred_fallthru
          _
        // Predicated region
        $region29: #{tpu_custom_call.1} parent=11 // pred_check
          %p223 = pneg %p149
        $region30: #{tpu_custom_call.1} parent=11 // pred_check_branch
          %225 = sbr.rel (%p223) target = $region32
        $region31: #{tpu_custom_call.1} parent=11 // pred_region
          _
        $region32: #{tpu_custom_call.1} parent=11 // pred_fallthru
          _
        // Predicated region
        $region33: #{tpu_custom_call.1} parent=11 // pred_check
          %p226 = pneg %p170
        $region34: #{tpu_custom_call.1} parent=11 // pred_check_branch
          %228 = sbr.rel (%p226) target = $region36
        $region35: #{tpu_custom_call.1} parent=11 // pred_region
          _
        $region36: #{tpu_custom_call.1} parent=11 // pred_fallthru
          _
      $region12: #{tpu_custom_call.1} parent=5 // pred_fallthru
        _
      %p229 = scmp.lt.s32.totalorder %s18, 4
      // Predicated region
      $region37: #{tpu_custom_call.1} parent=5 // pred_check
        %p230 = pneg %p229
      $region38: #{tpu_custom_call.1} parent=5 // pred_check_branch
        %232 = sbr.rel (%p230) target = $region40
      $region39: #{tpu_custom_call.1} parent=5 // pred_region
        // Predicated region
        $region41: #{tpu_custom_call.1} parent=39 // pred_check
          %p233 = pneg %p38
        $region42: #{tpu_custom_call.1} parent=39 // pred_check_branch
          %235 = sbr.rel (%p233) target = $region44
        $region43: #{tpu_custom_call.1} parent=39 // pred_region
          %s236 = smul.u32 16, %s18
          %p237 = scmp.lt.s32.totalorder %s236, 63
          %s238 = scalar_select %p237, %s236, 63
          %s239 = smul.addr %s238, 4
          %s240 = scalar_lea.vmem %s0, %s239
          %s241 = smul.u32 16, %s18
        $region44: #{tpu_custom_call.1} parent=39 // pred_fallthru
          _
      $region40: #{tpu_custom_call.1} parent=5 // pred_fallthru
        _
      %p242 = scmp.le.s32.totalorder 1, %s18
      %p243 = scmp.lt.s32.totalorder %s18, 5
      %p244 = pnand %p242, %p243
      %p245 = pneg %p244
      // Predicated region
      $region45: #{tpu_custom_call.1} parent=5 // pred_check
        _
      $region46: #{tpu_custom_call.1} parent=5 // pred_check_branch
        %247 = sbr.rel (%p244) target = $region48
      $region47: #{tpu_custom_call.1} parent=5 // pred_region
        %s248 = ssub.s32 %s18, 1
        %s249 = smul.u32 16, %s23
        %p250 = scmp.lt.s32.totalorder %s249, 63
        %s251 = scalar_select %p250, %s249, 63
        %s252 = smul.addr %s251, 4
        %s253 = scalar_lea.vmem %s0, %s252
        %p254 = pneg %p44
        %p255 = pneg %p41
        %p256 = pneg %p65
        %p257 = pneg %p62
        %p258 = pneg %p86
        %p259 = pneg %p83
        %p260 = pneg %p107
        %p261 = pneg %p104
        %p262 = pneg %p128
        %p263 = pneg %p125
        %p264 = pneg %p149
        %p265 = pneg %p146
        %p266 = pneg %p170
        %p267 = pneg %p167
        %p268 = pneg %p196
        %p269 = pneg %p193
        %s270 = sand.u32 %s183, 1
        %s271 = scalar_lea.sflag [#allocation4], %s270
        %s272 = sand.u32 %s183, 1
        %s273 = scalar_lea.vmem [#allocation3], %s272
        %s274 = smul.u32 16, %s23
        %p275 = scmp.lt.s32.totalorder %s274, 63
        %s276 = scalar_select %p275, %s274, 63
        %s277 = smul.addr %s276, 4
        %s278 = scalar_lea.vmem %s0, %s277
        %s279 = smul.u32 16, %s23
        %v281 = vld [vmem:[%s278] sm:$0xf]
        %v282 = vld [vmem:[%s278 + $0x4] sm:$0xf]
        %v283 = vld [vmem:[%s278 + $0x8] sm:$0xf]
        %v284 = vld [vmem:[%s278 + $0xc] sm:$0xf]
        %v285 = vld [vmem:[%s278 + $0x10] sm:$0xf]
        %v286 = vld [vmem:[%s278 + $0x14] sm:$0xf]
        %v287 = vld [vmem:[%s278 + $0x18] sm:$0xf]
        %v288 = vld [vmem:[%s278 + $0x1c] sm:$0xf]
        %v289 = vld [vmem:[%s278 + $0x20] sm:$0xf]
        %v290 = vld [vmem:[%s278 + $0x24] sm:$0xf]
        %v291 = vld [vmem:[%s278 + $0x28] sm:$0xf]
        %v292 = vld [vmem:[%s278 + $0x2c] sm:$0xf]
        %v293 = vld [vmem:[%s278 + $0x30] sm:$0xf]
        %v294 = vld [vmem:[%s278 + $0x34] sm:$0xf]
        %v295 = vld [vmem:[%s278 + $0x38] sm:$0xf]
        %v296 = vld [vmem:[%s278 + $0x3c] sm:$0xf]
        %v297 = vld [vmem:[%s1] sm:$0xf]
        %v298 = vld [vmem:[%s1 + $0x4] sm:$0xf]
        %v299 = vld [vmem:[%s2] sm:$0xff]
        %v300 = vld [vmem:[%s2 + $0x8] sm:$0xff]
        %302 = vset.pattern.permute.xlu0 0
        %303 = vperm.xlu0 %302, %v299
        %v304 = vpop.permute.xlu0 %303
        %307 = vset.pattern.permute.xlu0 0
        %308 = vperm.xlu0 %307, %v300
        %v309 = vpop.permute.xlu0 %308
        %v313 = vunpack.c.l.b16 %v297
        %v314 = vunpack.c.l.b16 %v298
        %v315 = vpack.c.b16 %v314, %v313
        %v332 = vunpack.c.l.b16 %v281
        %v333 = vunpack.c.l.b16 %v282
        %v334 = vunpack.c.l.b16 %v283
        %v335 = vunpack.c.l.b16 %v284
        %v336 = vunpack.c.l.b16 %v285
        %v337 = vunpack.c.l.b16 %v286
        %v338 = vunpack.c.l.b16 %v287
        %v339 = vunpack.c.l.b16 %v288
        %v340 = vunpack.c.l.b16 %v289
        %v341 = vunpack.c.l.b16 %v290
        %v342 = vunpack.c.l.b16 %v291
        %v343 = vunpack.c.l.b16 %v292
        %v344 = vunpack.c.l.b16 %v293
        %v345 = vunpack.c.l.b16 %v294
        %v346 = vunpack.c.l.b16 %v295
        %v347 = vunpack.c.l.b16 %v296
        %v348 = vpack.c.b16 %v333, %v332
        %v349 = vpack.c.b16 %v335, %v334
        %v350 = vpack.c.b16 %v337, %v336
        %v351 = vpack.c.b16 %v339, %v338
        %v352 = vpack.c.b16 %v341, %v340
        %v353 = vpack.c.b16 %v343, %v342
        %v354 = vpack.c.b16 %v345, %v344
        %v355 = vpack.c.b16 %v347, %v346
        %vm356 = vcmask 261120
        %v358 = vsel %vm356, %v315, 0
        %v361 = vsel %vm356, %v348, 0
        %v364 = vsel %vm356, %v349, 0
        %v367 = vsel %vm356, %v350, 0
        %v370 = vsel %vm356, %v351, 0
        %v373 = vsel %vm356, %v352, 0
        %v376 = vsel %vm356, %v353, 0
        %v379 = vsel %vm356, %v354, 0
        %v382 = vsel %vm356, %v355, 0
        %384 = vmatprep.subr.bf16.mxu0 0
        %385 = vmatpush1.bf16.xpose.msra.mxu0 %v382
        %386 = vmatprep.subr.bf16.mxu0 0
        %387 = vmatpush1.bf16.xpose.msra.mxu0 %v379
        %388 = vmatprep.subr.bf16.mxu0 0
        %389 = vmatpush1.bf16.xpose.msra.mxu0 %v376
        %390 = vmatprep.subr.bf16.mxu0 0
        %391 = vmatpush1.bf16.xpose.msra.mxu0 %v373
        %392 = vmatprep.subr.bf16.mxu0 0
        %393 = vmatpush1.bf16.xpose.msra.mxu0 %v370
        %394 = vmatprep.subr.bf16.mxu0 0
        %395 = vmatpush1.bf16.xpose.msra.mxu0 %v367
        %396 = vmatprep.subr.bf16.mxu0 0
        %397 = vmatpush1.bf16.xpose.msra.mxu0 %v364
        %398 = vmatprep.subr.bf16.mxu0 0
        %399 = vmatpush1.bf16.xpose.msra.mxu0 %v361
        %400 = vmatprep.subr.bf16.mxu0 0
        %401 = vmatpush2.bf16.xpose.msra.mxu0 0
        %402 = vmatprep.subr.bf16.mxu0 0
        %403 = vmatpush2.bf16.xpose.msra.mxu0 0
        %404 = vmatprep.subr.bf16.mxu0 0
        %405 = vmatpush2.bf16.xpose.msra.mxu0 0
        %406 = vmatprep.subr.bf16.mxu0 0
        %407 = vmatpush2.bf16.xpose.msra.mxu0 0
        %408 = vmatprep.subr.bf16.mxu0 0
        %409 = vmatpush2.bf16.xpose.msra.mxu0 0
        %410 = vmatprep.subr.bf16.mxu0 0
        %411 = vmatpush2.bf16.xpose.msra.mxu0 0
        %412 = vmatprep.subr.bf16.mxu0 0
        %413 = vmatpush2.bf16.xpose.msra.mxu0 0
        %414 = vmatprep.subr.bf16.mxu0 0
        %415 = vmatpush2.bf16.xpose.msra.mxu0 0
        %416 = vmatprep.mubr.bf16.mxu0 0
        %417 = vmatmul.mubr.bf16.gmra.mxu0 %v358
        %v418 = vpop.f32.mrf.mxu0
        %v419 = vadd.f32 %v304, %v418
        %v420 = vpop.f32.mrf.mxu0
        %v421 = vpop.f32.mrf.mxu0
        %v422 = vadd.f32 %v309, %v421
        %v423 = vpop.f32.mrf.mxu0
        %424 = vdwg.mxu0
        %v425 = vmax.f32 %v419, 0.0
        %v426 = vmax.f32 %v422, 0.0
        %v427 = vpack.c.bf16 %v426, %v425
        %v428 = vld [vmem:[%s3] sm:$0xf]
        %v429 = vld [vmem:[%s4] sm:$0xff]
        %431 = vset.pattern.permute.xlu0 0
        %432 = vperm.xlu0 %431, %v429
        %v433 = vpop.permute.xlu0 %432
        %vm435 = vcmask 130048
        %v437 = vsel %vm435, %v428, 0
        %439 = vmatprep.subr.bf16.mxu0 0
        %440 = vmatpush1.bf16.msra.mxu0 0
        %441 = vmatprep.subr.bf16.mxu0 0
        %442 = vmatpush1.bf16.msra.mxu0 0
        %443 = vmatprep.subr.bf16.mxu0 0
        %444 = vmatpush1.bf16.msra.mxu0 0
        %445 = vmatprep.subr.bf16.mxu0 0
        %446 = vmatpush1.bf16.msra.mxu0 0
        %447 = vmatprep.subr.bf16.mxu0 0
        %448 = vmatpush1.bf16.msra.mxu0 0
        %449 = vmatprep.subr.bf16.mxu0 0
        %450 = vmatpush1.bf16.msra.mxu0 0
        %451 = vmatprep.subr.bf16.mxu0 0
        %452 = vmatpush1.bf16.msra.mxu0 0
        %453 = vmatprep.subr.bf16.mxu0 0
        %454 = vmatpush1.bf16.msra.mxu0 %v427
        %455 = vmatprep.subr.bf16.mxu0 0
        %456 = vmatpush2.bf16.msra.mxu0 0
        %457 = vmatprep.subr.bf16.mxu0 0
        %458 = vmatpush2.bf16.msra.mxu0 0
        %459 = vmatprep.subr.bf16.mxu0 0
        %460 = vmatpush2.bf16.msra.mxu0 0
        %461 = vmatprep.subr.bf16.mxu0 0
        %462 = vmatpush2.bf16.msra.mxu0 0
        %463 = vmatprep.subr.bf16.mxu0 0
        %464 = vmatpush2.bf16.msra.mxu0 0
        %465 = vmatprep.subr.bf16.mxu0 0
        %466 = vmatpush2.bf16.msra.mxu0 0
        %467 = vmatprep.subr.bf16.mxu0 0
        %468 = vmatpush2.bf16.msra.mxu0 0
        %469 = vmatprep.subr.bf16.mxu0 0
        %470 = vmatpush2.bf16.msra.mxu0 0
        %471 = vmatprep.mubr.bf16.mxu0 0
        %472 = vmatmul.mubr.bf16.gmra.mxu0 %v437
        %v473 = vpop.f32.mrf.mxu0
        %v474 = vadd.f32 %v433, %v473
        %v475 = vpop.f32.mrf.mxu0
        %v476 = vpop.f32.mrf.mxu0
        %v477 = vpop.f32.mrf.mxu0
        %478 = vdwg.mxu0
        %v479 = vmax.f32 %v474, 0.0
        %v480 = vpack.c.bf16 %v479, %v479
        %v481 = vld [vmem:[%s5] sm:$0x1]
        %v482 = vld [vmem:[#allocation2] sm:$0x1]
        %484 = vset.pattern.permute.xlu0 0
        %485 = vperm.xlu0 %484, %v482
        %v486 = vpop.permute.xlu0 %485
        %v488 = vlaneseq
        %v489 = vshrl.u32 %v488, 7
        %v490 = vsub.s32 0, %v489
        %v491 = vrot.slane %v486, %v490
        %vm492 = vcmask 64512
        %v494 = vsel %vm492, %v481, 0
        %vm496 = vcmask 1043456
        %v498 = vsel %vm496, %v480, 0
        %500 = vmatprep.subr.bf16.mxu0 0
        %501 = vmatpush1.bf16.msra.mxu0 0
        %502 = vmatprep.subr.bf16.mxu0 0
        %503 = vmatpush1.bf16.msra.mxu0 0
        %504 = vmatprep.subr.bf16.mxu0 0
        %505 = vmatpush1.bf16.msra.mxu0 0
        %506 = vmatprep.subr.bf16.mxu0 0
        %507 = vmatpush1.bf16.msra.mxu0 0
        %508 = vmatprep.subr.bf16.mxu0 0
        %509 = vmatpush1.bf16.msra.mxu0 0
        %510 = vmatprep.subr.bf16.mxu0 0
        %511 = vmatpush1.bf16.msra.mxu0 0
        %512 = vmatprep.subr.bf16.mxu0 0
        %513 = vmatpush1.bf16.msra.mxu0 0
        %514 = vmatprep.subr.bf16.mxu0 0
        %515 = vmatpush1.bf16.msra.mxu0 %v498
        %516 = vmatprep.subr.bf16.mxu0 0
        %517 = vmatpush2.bf16.msra.mxu0 0
        %518 = vmatprep.subr.bf16.mxu0 0
        %519 = vmatpush2.bf16.msra.mxu0 0
        %520 = vmatprep.subr.bf16.mxu0 0
        %521 = vmatpush2.bf16.msra.mxu0 0
        %522 = vmatprep.subr.bf16.mxu0 0
        %523 = vmatpush2.bf16.msra.mxu0 0
        %524 = vmatprep.subr.bf16.mxu0 0
        %525 = vmatpush2.bf16.msra.mxu0 0
        %526 = vmatprep.subr.bf16.mxu0 0
        %527 = vmatpush2.bf16.msra.mxu0 0
        %528 = vmatprep.subr.bf16.mxu0 0
        %529 = vmatpush2.bf16.msra.mxu0 0
        %530 = vmatprep.subr.bf16.mxu0 0
        %531 = vmatpush2.bf16.msra.mxu0 0
        %532 = vmatprep.mubr.bf16.mxu0 0
        %533 = vmatmul.mubr.bf16.gmra.mxu0 %v494
        %v534 = vpop.f32.mrf.mxu0
        %v535 = vadd.f32 %v491, %v534
        %v536 = vpop.f32.mrf.mxu0
        %v537 = vpop.f32.mrf.mxu0
        %v538 = vpop.f32.mrf.mxu0
        %539 = vdwg.mxu0
        %540 = vst [vmem:[%s273] sm:$0x1] %v535
        %s541 = sand.u32 %s183, 1
        %s542 = scalar_lea.sflag [#allocation4], %s541
        %s543 = sand.u32 %s183, 1
        %s544 = scalar_lea.vmem [#allocation3], %s543
        // Predicated region
        $region49: #{tpu_custom_call.1} parent=47 // pred_check
          %p545 = pneg %p193
        $region50: #{tpu_custom_call.1} parent=47 // pred_check_branch
          %547 = sbr.rel (%p545) target = $region52
        $region51: #{tpu_custom_call.1} parent=47 // pred_region
          %s549 = ssub.s32 16, 16
          %550 = vsyncadd %s542, %s549
          %s551 = smul.addr %s23, 16
          %s552 = scalar_lea.hbm %s7, %s551
          %s554 = sshll.u32 %s544, 4
          %s555 = int_to_ptr.vmem [resolvable:$true] %s554
          %557 = dma.vmem_to_hbm [thread:$0]  %s555, 16, %s552, %s542
        $region52: #{tpu_custom_call.1} parent=47 // pred_fallthru
          _
      $region48: #{tpu_custom_call.1} parent=5 // pred_fallthru
        _
      %p558 = scmp.le.s32.totalorder 2, %s18
      // Predicated region
      $region53: #{tpu_custom_call.1} parent=5 // pred_check
        %p559 = pneg %p558
      $region54: #{tpu_custom_call.1} parent=5 // pred_check_branch
        %561 = sbr.rel (%p559) target = $region56
      $region55: #{tpu_custom_call.1} parent=5 // pred_region
        %s562 = ssub.s32 %s18, 2
        // Predicated region
        $region57: #{tpu_custom_call.1} parent=55 // pred_check
          %p563 = pneg %p199
        $region58: #{tpu_custom_call.1} parent=55 // pred_check_branch
          %565 = sbr.rel (%p563) target = $region60
        $region59: #{tpu_custom_call.1} parent=55 // pred_region
          %s566 = sand.u32 %s184, 1
          %s567 = scalar_lea.sflag [#allocation4], %s566
          %s568 = sand.u32 %s184, 1
          %s569 = scalar_lea.vmem [#allocation3], %s568
          %570 = dma.done %s567, 16
        $region60: #{tpu_custom_call.1} parent=55 // pred_fallthru
          _
      $region56: #{tpu_custom_call.1} parent=5 // pred_fallthru
        _
    $region6: #{tpu_custom_call.1} parent=1 // loop_footer
      %s22 = sadd.s32 1, %s18
    $region7: #{tpu_custom_call.1} parent=1 // loop_footer_branch
      %17 = sbr.rel target = $region3
    $region8: #{tpu_custom_call.1} parent=1 // loop_exit
      _
    %571 = vsyncpa [#allocation4], 1
    %s572 = scalar_lea.sflag [#allocation4], 1
    %573 = vsyncpa %s572, 1

</llo_original>
